<compile_context>
chip_gen: v5e
topology: v5e:2x2
jax: 0.10.0
libtpu: 0.0.40
codegen_flags: <defaults>
</compile_context>

<pallas_src>
import jax
import jax.numpy as jnp
from jax.experimental import pallas as pl
from jax.experimental.pallas import tpu as pltpu

POOL = 2                         # AvgPool2d kernel size == stride
MAX_P_BYTES = 1 << 20            # cap on the constant pool matrix (zero-MAC guard)
TILE_TARGET = 8 << 20            # ~8 MiB of operand traffic per grid step
VMEM_LIMIT = 32 * 1024 * 1024    # explicit scoped-VMEM (v5e default is 16 MiB)


# ----------------------------- layout helpers ------------------------------ #

def _choose_rows_per_kernel_row(total_rows, W, max_p_bytes=MAX_P_BYTES):
    """Pick rg = image rows folded into one kernel row.

    Kd = rg*W (input lane dim), Nd = rg*W/4 (pooled lane dim).  Prefer the
    smallest rg with Nd % 128 == 0 (dense vst on the pooled side, full vreg
    lanes, Kd automatically % 128 too since Kd = 4*Nd) subject to the P-size
    cap; fall back to the densest pooled side that fits.  Since H is even the
    2x2 height pairs never cross an image boundary, so rg only needs to be an
    even divisor of the total row count N*C*H.
    """
    Wo = W // POOL
    cands = []
    for rg in range(POOL, total_rows + 1, POOL):
        Kd, Nd = rg * W, (rg // POOL) * Wo
        if Kd * Nd * 4 > max_p_bytes:
            break                              # P grows quadratically in rg
        if total_rows % rg:
            continue
        cands.append((rg, Kd, Nd))
    if not cands:
        return POOL
    dense = [c for c in cands if c[2] % 128 == 0]
    if dense:
        return min(dense, key=lambda c: c[2])[0]          # Nd = 128 when reachable
    return max(cands, key=lambda c: (min(c[2], 128), -c[1] * c[2]))[0]


def _layout(shape):
    N, C, H, W = shape
    assert H % POOL == 0 and W % POOL == 0, "odd H/W not supported (PyTorch floor-pools)"
    rg = _choose_rows_per_kernel_row(N * C * H, W)
    Kd, Nd = rg * W, (rg // POOL) * (W // POOL)
    M = (N * C * H) // rg
    return Kd, Nd, M


def _pool_matrix(rg, W, dtype=jnp.float32):
    """P: (rg*W, (rg/2)*(W/2)) such that x_rowgroup @ P == 2x2 avg pool."""
    Wo = W // POOL
    Nd = (rg // POOL) * Wo
    g_idx = jnp.arange(rg)[:, None]                      # (rg, 1)
    w_idx = jnp.arange(W)[None, :]                       # (1, W)
    col = (g_idx // POOL) * Wo + (w_idx // POOL)         # output column per tap
    P = jax.nn.one_hot(col.reshape(-1), Nd, dtype=dtype) / (POOL * POOL)
    return P                                             # (rg*W, Nd)


def _sublane(dtype):
    # sublane multiple of the second-to-last block dim (8 for f32, 16 bf16, 32 i8)
    return max(8, 32 // jnp.dtype(dtype).itemsize)


def _choose_row_tile(m, row_bytes, sub=8, target_bytes=TILE_TARGET):
    """Rows per grid step: ~8 MiB tiles (amortize step overhead), but never
    more than ~half the rows so multi-row workloads always yield >= 2 grid
    steps for the "parallel" axis (v7x megacore); multiple of the dtype's
    sublane count."""
    if m <= sub:
        return m
    bt = min(m, max(sub, target_bytes // max(row_bytes, 1)))
    half = -(-((m + 1) // 2) // sub) * sub               # >= ceil(m/2), sublane-aligned
    bt = min(bt, half)
    return max(sub, (bt // sub) * sub)


# ----------------------------- kernels ------------------------------------- #

def _pool_fwd_kernel(p_ref, x_ref, z_ref):
    """z_rows = x_rows @ P  (merged 2x2 avg-pool of a row tile, one MXU matmul)."""
    p = p_ref[...]
    x = x_ref[...].astype(p.dtype)
    z = jnp.dot(x, p, preferred_element_type=jnp.float32)
    z_ref[...] = z.astype(z_ref.dtype)


def _pool_attr_kernel(p_ref, x_ref, z_ref, r_ref, out_ref):
    """attr_rows = x_rows * (zdiv(R, z) @ P^T); z comes precomputed from fwd."""
    p = p_ref[...]
    x = x_ref[...].astype(jnp.float32)                   # (bt, Kd)
    z = z_ref[...].astype(jnp.float32)                   # (bt, Nd)
    r = r_ref[...].astype(jnp.float32)                   # (bt, Nd)
    # zdiv(R, z): 0 where z == 0, else R/z.  reciprocal + one select + VALU mul
    # (reciprocal runs on the EUP slot; approx=True would loosen accuracy).
    inv = jnp.where(z == 0.0, 0.0,
                    pl.reciprocal(jnp.where(z == 0.0, 1.0, z), approx=False))
    g = r * inv
    # adjoint of the pool: cplus = g @ P^T, as a dot_general with a transposed
    # contraction on the already-resident P (no separate P^T operand).
    c = jax.lax.dot_general(
        g.astype(p.dtype), p,
        dimension_numbers=(((1,), (1,)), ((), ())),
        preferred_element_type=jnp.float32)              # (bt, Kd)
    out_ref[...] = (x * c).astype(out_ref.dtype)


# ----------------------------- wrappers ------------------------------------ #

def avg_pool2d_pallas(x, row_tile=None, compute_dtype=jnp.float32):
    """x: (N, C, H, W) -> (N, C, H//2, W//2), 2x2 average pooling via Pallas."""
    N, C, H, W = x.shape
    Ho, Wo = H // POOL, W // POOL
    Kd, Nd, M = _layout(x.shape)
    rg = Kd // W

    xf = x.reshape(M, Kd)                                 # free contiguous reshape
    P = _pool_matrix(rg, W, compute_dtype)
    bt = (_choose_row_tile(M, (Kd + Nd) * x.dtype.itemsize, _sublane(x.dtype))
          if row_tile is None else row_tile)
    grid = (pl.cdiv(M, bt),)

    zf = pl.pallas_call(
        _pool_fwd_kernel,
        out_shape=jax.ShapeDtypeStruct((M, Nd), x.dtype),
        grid_spec=pltpu.PrefetchScalarGridSpec(
            num_scalar_prefetch=0,
            grid=grid,
            in_specs=[
                pl.BlockSpec((Kd, Nd), lambda i: (0, 0)),   # pool matrix (resident)
                pl.BlockSpec((bt, Kd), lambda i: (i, 0)),   # row tile (lane-dense)
            ],
            out_specs=pl.BlockSpec((bt, Nd), lambda i: (i, 0)),  # Nd % 128 == 0
        ),
        compiler_params=pltpu.CompilerParams(
            dimension_semantics=("parallel",),
            vmem_limit_bytes=VMEM_LIMIT),
    )(P, xf)
    return zf.reshape(N, C, Ho, Wo)                        # free contiguous reshape


def pool_attribution_pallas(x, z, R, row_tile=None, compute_dtype=jnp.float32):
    """LRP-style relevance redistribution through a 2x2 avg pool (z reused from fwd)."""
    N, C, H, W = x.shape
    Ho, Wo = H // POOL, W // POOL
    assert z.shape == (N, C, Ho, Wo) and R.shape == (N, C, Ho, Wo)
    Kd, Nd, M = _layout(x.shape)
    rg = Kd // W

    xf = x.reshape(M, Kd)
    zf = z.reshape(M, Nd)
    rf = R.reshape(M, Nd)
    P = _pool_matrix(rg, W, compute_dtype)
    bt = (_choose_row_tile(M, (2 * Kd + 2 * Nd) * x.dtype.itemsize, _sublane(x.dtype))
          if row_tile is None else row_tile)
    grid = (pl.cdiv(M, bt),)

    out = pl.pallas_call(
        _pool_attr_kernel,
        out_shape=jax.ShapeDtypeStruct((M, Kd), x.dtype),
        grid_spec=pltpu.PrefetchScalarGridSpec(
            num_scalar_prefetch=0,
            grid=grid,
            in_specs=[
                pl.BlockSpec((Kd, Nd), lambda i: (0, 0)),   # pool matrix (resident)
                pl.BlockSpec((bt, Kd), lambda i: (i, 0)),   # a (stored input)
                pl.BlockSpec((bt, Nd), lambda i: (i, 0)),   # z (stored fwd output)
                pl.BlockSpec((bt, Nd), lambda i: (i, 0)),   # R (incoming relevance)
            ],
            out_specs=pl.BlockSpec((bt, Kd), lambda i: (i, 0)),  # lane-dense output
        ),
        compiler_params=pltpu.CompilerParams(
            dimension_semantics=("parallel",),
            vmem_limit_bytes=VMEM_LIMIT),
    )(P, xf, zf, rf)
    return out.reshape(N, C, H, W)


# ----------------------------- module -------------------------------------- #

class PoolingAttributor:
    """JAX/Pallas port of ntorx PoolingAttributor cast over AvgPool2d(2, 2)."""
    # TODO(synk): Attributor.of/.cast are Python metaprogramming (dynamic
    # subclassing) with no kernel equivalent; only forward/attribution ported.

    def __init__(self, pool_op=None):
        self._pool_op = pool_op
        self._in = None
        self._z = None

    def forward(self, x):
        self._in = x                                       # mirrors `self._in = x`
        z = avg_pool2d_pallas(x) if self._pool_op is None else self._pool_op(x)
        self._z = z                                        # reused by attribution
        return z

    __call__ = forward

    def attribution(self, out):
        R, a = out, self._in
        if self._pool_op is None:
            # zdiv, the pool adjoint and a*cplus fused in one Pallas kernel;
            # z is reused from forward() (identical to the PyTorch recompute).
            return pool_attribution_pallas(a, self._z, R)
        # TODO(synk): an arbitrary user pool_op has no in-kernel adjoint; fall
        # back to jax.vjp (pure JAX) for that path.
        z, vjp = jax.vjp(self._pool_op, a)
        g = jnp.where(z == 0.0, 0.0, R / jnp.where(z == 0.0, 1.0, z))
        (cplus,) = vjp(g)
        return a * cplus


# ----------------------------- demo / check -------------------------------- #

if __name__ == "__main__":
    key = jax.random.PRNGKey(0)
    N, C, H, W = 2, 4, 16, 16
    x = jax.random.normal(key, (N, C, H, W), dtype=jnp.float32)

    mod = PoolingAttributor()
    z = mod(x)                            # (2, 4, 8, 8)
    R = z                                 # relevance of the pooled output
    attr = mod.attribution(R)             # (2, 4, 16, 16)
    jax.block_until_ready((z, attr))

    # pure-JAX reference
    Ho, Wo = H // POOL, W // POOL
    z_ref = x.reshape(N, C, Ho, POOL, Wo, POOL).mean(axis=(3, 5))
    safe = jnp.where(z_ref == 0.0, 1.0, z_ref)
    g = jnp.where(z_ref == 0.0, 0.0, R / safe)
    cplus = jnp.repeat(jnp.repeat(g, POOL, axis=2), POOL, axis=3) / (POOL * POOL)
    attr_ref = x * cplus

    assert z.shape == (N, C, Ho, Wo) and attr.shape == (N, C, H, W)
    assert jnp.allclose(z, z_ref, rtol=1e-5, atol=1e-5)
    assert jnp.allclose(attr, attr_ref, rtol=1e-5, atol=1e-5)

    # Secondary check: larger batch so the auto-chosen row tile yields a
    # >= 2-step grid (exercises the "parallel" axis that shards across v7x's
    # two TensorCores) with R = ones (non-trivial zdiv).
    x2 = jax.random.normal(jax.random.PRNGKey(1), (4, 16, 16, 16), jnp.float32)
    mod2 = PoolingAttributor()
    z2 = mod2(x2)                         # (4, 16, 8, 8)
    r2 = jnp.ones_like(z2)
    a2 = mod2.attribution(r2)             # (4, 16, 16, 16)
    jax.block_until_ready((z2, a2))

    z2_ref = x2.reshape(4, 16, 8, POOL, 8, POOL).mean(axis=(3, 5))
    assert jnp.allclose(z2, z2_ref, rtol=1e-5, atol=1e-5)
    # The attribution divides R by the z produced by forward(); build the
    # reference with that same z.  (Dividing by an independently recomputed
    # z_ref amplifies the f32 summation-order difference wherever z ~ 0 when
    # R doesn't scale with z — this caused the previous rev's assert failure.)
    g2 = jnp.where(z2 == 0.0, 0.0, r2 / jnp.where(z2 == 0.0, 1.0, z2))
    a2_ref = x2 * (jnp.repeat(jnp.repeat(g2, POOL, axis=2), POOL, axis=3) / (POOL * POOL))
    assert jnp.allclose(a2, a2_ref, rtol=1e-5, atol=1e-5)

    print("KERNEL_OK")
</pallas_src>

<mosaic_0001>
module attributes {stable_mosaic.version = 11 : i64} {
  func.func @_pool_fwd_kernel(%arg0: i32, %arg1: memref<512x128xf32, #tpu.memory_space<vmem>>, %arg2: memref<4x512xf32, #tpu.memory_space<vmem>>, %arg3: memref<4x128xf32, #tpu.memory_space<vmem>>) attributes {dimension_semantics = [#tpu.dimension_semantics<parallel>], iteration_bounds = array<i64: 1>, scalar_prefetch = 0 : i64, scratch_operands = 0 : i64, tpu.core_type = #tpu.core_type<tc>, window_params = [{pipeline_mode = #tpu.pipeline_mode<synchronous>, transform_indices = @transform_0, window_bounds = array<i64: 512, 128>}, {transform_indices = @transform_1, window_bounds = array<i64: 4, 512>}, {transform_indices = @transform_2, window_bounds = array<i64: 4, 128>}]} {
    %c0 = arith.constant 0 : index
    %c0_0 = arith.constant 0 : index
    %0 = vector.load %arg1[%c0, %c0_0] : memref<512x128xf32, #tpu.memory_space<vmem>>, vector<512x128xf32>
    %c0_1 = arith.constant 0 : index
    %c0_2 = arith.constant 0 : index
    %1 = vector.load %arg2[%c0_1, %c0_2] : memref<4x512xf32, #tpu.memory_space<vmem>>, vector<4x512xf32>
    %cst = arith.constant dense<0.000000e+00> : vector<4x128xf32>
    %2 = tpu.matmul %1, %0, %cst {dimension_numbers = #tpu.dot_dimension_numbers<[1], [0], [0], [1], [0, 0, 1, 1], [], []>} : vector<4x512xf32>, vector<512x128xf32>, vector<4x128xf32> -> vector<4x128xf32>
    %c0_3 = arith.constant 0 : index
    %c0_4 = arith.constant 0 : index
    %3 = vector.load %arg3[%c0_3, %c0_4] : memref<4x128xf32, #tpu.memory_space<vmem>>, vector<4x128xf32>
    tpu.vector_store %arg3[%c0_3, %c0_4], %2 {strides = array<i32>} : memref<4x128xf32, #tpu.memory_space<vmem>>, vector<4x128xf32>,
    return
  }
  func.func @transform_0(%arg0: i32) -> (i32, i32) {
    %c0_i32 = arith.constant 0 : i32
    %c0_i32_0 = arith.constant 0 : i32
    %c0_i32_1 = arith.constant 0 : i32
    return %c0_i32, %c0_i32_0 : i32, i32
  }
  func.func @transform_1(%arg0: i32) -> (i32, i32) {
    %c0_i32 = arith.constant 0 : i32
    %c0_i32_0 = arith.constant 0 : i32
    return %arg0, %c0_i32 : i32, i32
  }
  func.func @transform_2(%arg0: i32) -> (i32, i32) {
    %c0_i32 = arith.constant 0 : i32
    %c0_i32_0 = arith.constant 0 : i32
    return %arg0, %c0_i32 : i32, i32
  }
}

</mosaic_0001>

<llo_original>
// kernel: tpu_custom_call.1
$region0: #{tpu_custom_call.1}
  #allocation0 [shape = 'u32[]', space=smem, size = 0x4, offset = 0x4, fixed_abs, tag = 'smem constant byte address 0x4 - core index']
  #allocation1 [shape = 'u32[72,128]{1,0:T(1,128)}', space=vmem, size = 0x9000, scoped, tag = 'internal scratch']
  %s0 = inlined_call_operand.hbm [shape: f32[512,128], index: 0, kind: input, shape index: {}]
  %s1 = inlined_call_operand.hbm [shape: f32[4,512], index: 1, kind: input, shape index: {}]
  %s2 = inlined_call_operand.hbm [shape: f32[4,128], index: 2, kind: output, shape index: {}]
  %s3 = sld [smem:[#allocation0]]
  $region26: #{tpu_custom_call.1} parent=0
    _
  %s5 = ssub.s32 1, %s3
  %s6 = scalar_select 0, %s5, %s3
  $region1: #{tpu_custom_call.1} parent=0
    #allocation2 [shape = 'u8[262144]{0}', space=vmem, size = 0x40000, scoped, tag = 'input window, operand 0, single buffered']
    #allocation3 [shape = 's32[1]{0}', space=sflag, size = 0x4, scoped, tag = 'scoped memory for tpu_custom_call.1']
    #allocation4 [shape = 's32[1]{0}', space=sflag, size = 0x4, scoped, tag = 'scoped memory for tpu_custom_call.1']
    #allocation5 [shape = 'u8[8192]{0}', space=vmem, size = 0x2000, scoped, tag = 'input window, operand 1, single buffered']
    #allocation6 [shape = 's32[1]{0}', space=sflag, size = 0x4, scoped, tag = 'scoped memory for tpu_custom_call.1']
    #allocation7 [shape = 'u8[2048]{0}', space=vmem, size = 0x800, scoped, tag = 'output window, operand 0, single buffered']
    %7 = vsyncpa [#allocation3], 0
    %8 = vsyncpa [#allocation6], 0
    %9 = vsyncpa [#allocation4], 0
    // Predicated region
    $region2: #{tpu_custom_call.1} parent=1 // pred_check
      _
    $region3: #{tpu_custom_call.1} parent=1 // pred_check_branch
      %11 = sbr.rel (0) target = $region5
    $region4: #{tpu_custom_call.1} parent=1 // pred_region
      %13 = vsyncadd [#allocation3], 0
      %s14 = sshll.u32 %s0, 4
      %s15 = int_to_ptr.hbm [resolvable:$true] %s14
      %s16 = sshll.u32 [#allocation2], 4
      %s17 = int_to_ptr.vmem [resolvable:$true] %s16
      %22 = dma.hbm_to_vmem [thread:$0]  %s15, 8192, %s17, [#allocation3], 128, 128, 8
    $region5: #{tpu_custom_call.1} parent=1 // pred_fallthru
      _
    // Predicated region
    $region6: #{tpu_custom_call.1} parent=1 // pred_check
      _
    $region7: #{tpu_custom_call.1} parent=1 // pred_check_branch
      %24 = sbr.rel (0) target = $region9
    $region8: #{tpu_custom_call.1} parent=1 // pred_region
      %26 = vsyncadd [#allocation6], 0
      %s28 = sshll.u32 %s1, 4
      %s29 = int_to_ptr.hbm [resolvable:$true] %s28
      %s30 = sshll.u32 [#allocation5], 4
      %s31 = int_to_ptr.vmem [resolvable:$true] %s30
      %33 = dma.hbm_to_vmem [thread:$0]  %s29, 256, %s31, [#allocation6]
    $region9: #{tpu_custom_call.1} parent=1 // pred_fallthru
      _
    // Predicated region
    $region10: #{tpu_custom_call.1} parent=1 // pred_check
      _
    $region11: #{tpu_custom_call.1} parent=1 // pred_check_branch
      %35 = sbr.rel (0) target = $region13
    $region12: #{tpu_custom_call.1} parent=1 // pred_region
      %37 = dma.done [#allocation3], 8192
    $region13: #{tpu_custom_call.1} parent=1 // pred_fallthru
      _
    // Predicated region
    $region14: #{tpu_custom_call.1} parent=1 // pred_check
      _
    $region15: #{tpu_custom_call.1} parent=1 // pred_check_branch
      %39 = sbr.rel (0) target = $region17
    $region16: #{tpu_custom_call.1} parent=1 // pred_region
      %41 = dma.done [#allocation6], 256
    $region17: #{tpu_custom_call.1} parent=1 // pred_fallthru
      _
    %v42 = vld [vmem:[#allocation2] sm:$0xff]
    %v43 = vld [vmem:[#allocation2 + $0x8] sm:$0xff]
    %v44 = vld [vmem:[#allocation2 + $0x10] sm:$0xff]
    %v45 = vld [vmem:[#allocation2 + $0x18] sm:$0xff]
    %v46 = vld [vmem:[#allocation2 + $0x20] sm:$0xff]
    %v47 = vld [vmem:[#allocation2 + $0x28] sm:$0xff]
    %v48 = vld [vmem:[#allocation2 + $0x30] sm:$0xff]
    %v49 = vld [vmem:[#allocation2 + $0x38] sm:$0xff]
    %v50 = vld [vmem:[#allocation2 + $0x40] sm:$0xff]
    %v51 = vld [vmem:[#allocation2 + $0x48] sm:$0xff]
    %v52 = vld [vmem:[#allocation2 + $0x50] sm:$0xff]
    %v53 = vld [vmem:[#allocation2 + $0x58] sm:$0xff]
    %v54 = vld [vmem:[#allocation2 + $0x60] sm:$0xff]
    %v55 = vld [vmem:[#allocation2 + $0x68] sm:$0xff]
    %v56 = vld [vmem:[#allocation2 + $0x70] sm:$0xff]
    %v57 = vld [vmem:[#allocation2 + $0x78] sm:$0xff]
    %v58 = vld [vmem:[#allocation2 + $0x80] sm:$0xff]
    %v59 = vld [vmem:[#allocation2 + $0x88] sm:$0xff]
    %v60 = vld [vmem:[#allocation2 + $0x90] sm:$0xff]
    %v61 = vld [vmem:[#allocation2 + $0x98] sm:$0xff]
    %v62 = vld [vmem:[#allocation2 + $0xa0] sm:$0xff]
    %v63 = vld [vmem:[#allocation2 + $0xa8] sm:$0xff]
    %v64 = vld [vmem:[#allocation2 + $0xb0] sm:$0xff]
    %v65 = vld [vmem:[#allocation2 + $0xb8] sm:$0xff]
    %v66 = vld [vmem:[#allocation2 + $0xc0] sm:$0xff]
    %v67 = vld [vmem:[#allocation2 + $0xc8] sm:$0xff]
    %v68 = vld [vmem:[#allocation2 + $0xd0] sm:$0xff]
    %v69 = vld [vmem:[#allocation2 + $0xd8] sm:$0xff]
    %v70 = vld [vmem:[#allocation2 + $0xe0] sm:$0xff]
    %v71 = vld [vmem:[#allocation2 + $0xe8] sm:$0xff]
    %v72 = vld [vmem:[#allocation2 + $0xf0] sm:$0xff]
    %v73 = vld [vmem:[#allocation2 + $0xf8] sm:$0xff]
    %v74 = vld [vmem:[#allocation2 + $0x100] sm:$0xff]
    %v75 = vld [vmem:[#allocation2 + $0x108] sm:$0xff]
    %v76 = vld [vmem:[#allocation2 + $0x110] sm:$0xff]
    %v77 = vld [vmem:[#allocation2 + $0x118] sm:$0xff]
    %v78 = vld [vmem:[#allocation2 + $0x120] sm:$0xff]
    %v79 = vld [vmem:[#allocation2 + $0x128] sm:$0xff]
    %v80 = vld [vmem:[#allocation2 + $0x130] sm:$0xff]
    %v81 = vld [vmem:[#allocation2 + $0x138] sm:$0xff]
    %v82 = vld [vmem:[#allocation2 + $0x140] sm:$0xff]
    %v83 = vld [vmem:[#allocation2 + $0x148] sm:$0xff]
    %v84 = vld [vmem:[#allocation2 + $0x150] sm:$0xff]
    %v85 = vld [vmem:[#allocation2 + $0x158] sm:$0xff]
    %v86 = vld [vmem:[#allocation2 + $0x160] sm:$0xff]
    %v87 = vld [vmem:[#allocation2 + $0x168] sm:$0xff]
    %v88 = vld [vmem:[#allocation2 + $0x170] sm:$0xff]
    %v89 = vld [vmem:[#allocation2 + $0x178] sm:$0xff]
    %v90 = vld [vmem:[#allocation2 + $0x180] sm:$0xff]
    %v91 = vld [vmem:[#allocation2 + $0x188] sm:$0xff]
    %v92 = vld [vmem:[#allocation2 + $0x190] sm:$0xff]
    %v93 = vld [vmem:[#allocation2 + $0x198] sm:$0xff]
    %v94 = vld [vmem:[#allocation2 + $0x1a0] sm:$0xff]
    %v95 = vld [vmem:[#allocation2 + $0x1a8] sm:$0xff]
    %v96 = vld [vmem:[#allocation2 + $0x1b0] sm:$0xff]
    %v97 = vld [vmem:[#allocation2 + $0x1b8] sm:$0xff]
    %v98 = vld [vmem:[#allocation2 + $0x1c0] sm:$0xff]
    %v99 = vld [vmem:[#allocation2 + $0x1c8] sm:$0xff]
    %v100 = vld [vmem:[#allocation2 + $0x1d0] sm:$0xff]
    %v101 = vld [vmem:[#allocation2 + $0x1d8] sm:$0xff]
    %v102 = vld [vmem:[#allocation2 + $0x1e0] sm:$0xff]
    %v103 = vld [vmem:[#allocation2 + $0x1e8] sm:$0xff]
    %v104 = vld [vmem:[#allocation2 + $0x1f0] sm:$0xff]
    %v105 = vld [vmem:[#allocation2 + $0x1f8] sm:$0xff]
    %v106 = vld [vmem:[#allocation5] sm:$0xff]
    %v107 = vld [vmem:[#allocation5 + $0x8] sm:$0xff]
    %110 = vst [vmem:[#allocation1] ss:$2 sm:$0xff] %v106
    %s111 = scalar_lea.vmem [#allocation1], 16
    %112 = vst [vmem:[%s111] ss:$2 sm:$0xff] %v107
    %v113 = vld.sshfl [vmem:[#allocation1] sm:$0xff pattern:$0x75316420]
    %v114 = vld.sshfl [vmem:[#allocation1 + $0x8] sm:$0xff pattern:$0x75316420]
    %v115 = vld.sshfl [vmem:[#allocation1 + $0x10] sm:$0xff pattern:$0x75316420]
    %v116 = vld.sshfl [vmem:[#allocation1 + $0x18] sm:$0xff pattern:$0x75316420]
    %121 = vmatpush.msra.mxu0 %v57
    %122 = vmatpush.msra.mxu0 %v56
    %123 = vmatpush.msra.mxu0 %v55
    %124 = vmatpush.msra.mxu0 %v54
    %125 = vmatpush.msra.mxu0 %v53
    %126 = vmatpush.msra.mxu0 %v52
    %127 = vmatpush.msra.mxu0 %v51
    %128 = vmatpush.msra.mxu0 %v50
    %129 = vmatpush.msra.mxu0 %v49
    %130 = vmatpush.msra.mxu0 %v48
    %131 = vmatpush.msra.mxu0 %v47
    %132 = vmatpush.msra.mxu0 %v46
    %133 = vmatpush.msra.mxu0 %v45
    %134 = vmatpush.msra.mxu0 %v44
    %135 = vmatpush.msra.mxu0 %v43
    %136 = vmatpush.msra.mxu0 %v42
    %137 = vmatmul.f32.gmra.mxu0 %v113
    %v138 = vpop.f32.mrf.mxu0
    %v139 = vadd.f32 0.0, %v138
    %140 = vdwg.mxu0
    %141 = vmatpush.msra.mxu0 %v73
    %142 = vmatpush.msra.mxu0 %v72
    %143 = vmatpush.msra.mxu0 %v71
    %144 = vmatpush.msra.mxu0 %v70
    %145 = vmatpush.msra.mxu0 %v69
    %146 = vmatpush.msra.mxu0 %v68
    %147 = vmatpush.msra.mxu0 %v67
    %148 = vmatpush.msra.mxu0 %v66
    %149 = vmatpush.msra.mxu0 %v65
    %150 = vmatpush.msra.mxu0 %v64
    %151 = vmatpush.msra.mxu0 %v63
    %152 = vmatpush.msra.mxu0 %v62
    %153 = vmatpush.msra.mxu0 %v61
    %154 = vmatpush.msra.mxu0 %v60
    %155 = vmatpush.msra.mxu0 %v59
    %156 = vmatpush.msra.mxu0 %v58
    %157 = vmatmul.f32.gmra.mxu0 %v114
    %v158 = vpop.f32.mrf.mxu0
    %v159 = vadd.f32 %v139, %v158
    %160 = vdwg.mxu0
    %161 = vmatpush.msra.mxu0 %v89
    %162 = vmatpush.msra.mxu0 %v88
    %163 = vmatpush.msra.mxu0 %v87
    %164 = vmatpush.msra.mxu0 %v86
    %165 = vmatpush.msra.mxu0 %v85
    %166 = vmatpush.msra.mxu0 %v84
    %167 = vmatpush.msra.mxu0 %v83
    %168 = vmatpush.msra.mxu0 %v82
    %169 = vmatpush.msra.mxu0 %v81
    %170 = vmatpush.msra.mxu0 %v80
    %171 = vmatpush.msra.mxu0 %v79
    %172 = vmatpush.msra.mxu0 %v78
    %173 = vmatpush.msra.mxu0 %v77
    %174 = vmatpush.msra.mxu0 %v76
    %175 = vmatpush.msra.mxu0 %v75
    %176 = vmatpush.msra.mxu0 %v74
    %177 = vmatmul.f32.gmra.mxu0 %v115
    %v178 = vpop.f32.mrf.mxu0
    %v179 = vadd.f32 %v159, %v178
    %180 = vdwg.mxu0
    %181 = vmatpush.msra.mxu0 %v105
    %182 = vmatpush.msra.mxu0 %v104
    %183 = vmatpush.msra.mxu0 %v103
    %184 = vmatpush.msra.mxu0 %v102
    %185 = vmatpush.msra.mxu0 %v101
    %186 = vmatpush.msra.mxu0 %v100
    %187 = vmatpush.msra.mxu0 %v99
    %188 = vmatpush.msra.mxu0 %v98
    %189 = vmatpush.msra.mxu0 %v97
    %190 = vmatpush.msra.mxu0 %v96
    %191 = vmatpush.msra.mxu0 %v95
    %192 = vmatpush.msra.mxu0 %v94
    %193 = vmatpush.msra.mxu0 %v93
    %194 = vmatpush.msra.mxu0 %v92
    %195 = vmatpush.msra.mxu0 %v91
    %196 = vmatpush.msra.mxu0 %v90
    %197 = vmatmul.f32.gmra.mxu0 %v116
    %v198 = vpop.f32.mrf.mxu0
    %v199 = vadd.f32 %v179, %v198
    %200 = vdwg.mxu0
    %201 = vst [vmem:[#allocation7] sm:$0xf] %v199
    // Predicated region
    $region18: #{tpu_custom_call.1} parent=1 // pred_check
      _
    $region19: #{tpu_custom_call.1} parent=1 // pred_check_branch
      %203 = sbr.rel (0) target = $region21
    $region20: #{tpu_custom_call.1} parent=1 // pred_region
      %205 = vsyncadd [#allocation4], 0
      %s207 = sshll.u32 [#allocation7], 4
      %s208 = int_to_ptr.vmem [resolvable:$true] %s207
      %s209 = sshll.u32 %s2, 4
      %s210 = int_to_ptr.hbm [resolvable:$true] %s209
      %212 = dma.vmem_to_hbm [thread:$0]  %s208, 64, %s210, [#allocation4]
    $region21: #{tpu_custom_call.1} parent=1 // pred_fallthru
      _
    // Predicated region
    $region22: #{tpu_custom_call.1} parent=1 // pred_check
      _
    $region23: #{tpu_custom_call.1} parent=1 // pred_check_branch
      %214 = sbr.rel (0) target = $region25
    $region24: #{tpu_custom_call.1} parent=1 // pred_region
      %216 = dma.done [#allocation4], 64
    $region25: #{tpu_custom_call.1} parent=1 // pred_fallthru
      _
    %217 = vsyncpa [#allocation3], 1
    %218 = vsyncpa [#allocation6], 1
    %219 = vsyncpa [#allocation4], 1

</llo_original>
